<compile_context>
chip_gen: v7x
topology: tpu7x:2x2x1
jax: 0.10.0
libtpu: 0.0.40
codegen_flags: <defaults>
</compile_context>

<pallas_src>
import functools
import math
from typing import NamedTuple, Optional

import jax
import jax.numpy as jnp
from jax.experimental import pallas as pl
from jax.experimental.pallas import tpu as pltpu

_MIB = 1024 * 1024


def _round_up(x, n):
    return ((x + n - 1) // n) * n


def _gelu_tanh(x):
    # PyTorch F.gelu(x, approximate='tanh')
    c = math.sqrt(2.0 / math.pi)
    return 0.5 * x * (1.0 + jnp.tanh(c * (x + 0.044715 * x * x * x)))


def _device_info():
    """Returns (device_kind lowercase, usable VMEM budget, capacity, megacore?)."""
    try:
        kind = jax.devices()[0].device_kind.lower()
    except Exception:
        kind = ""
    try:
        capacity = int(pltpu.get_tpu_info().vmem_capacity_bytes)
    except Exception:
        capacity = 64 * _MIB  # conservative fallback, safe on every generation
    budget = max(32 * _MIB, capacity - 10 * _MIB)
    if ("v7" in kind) or ("7x" in kind):
        # v7x: 64 MiB per TensorCore regardless of what the query reports.
        budget = min(budget, 56 * _MIB)
    megacore = any(t in kind for t in ("v4", "v5p", "v7", "7x"))
    return kind, budget, capacity, megacore


def _vmem_estimate(tm, ti, h, in_isz, out_isz):
    """Double-buffered blocks + accumulator + in-kernel temporaries + scratch."""
    blocks = (2 * tm * h * in_isz            # x rows (double-buffered)
              + 2 * h * 2 * ti * in_isz      # fused [gate|up] weight tile
              + 2 * ti * h * in_isz          # down-proj weight tile
              + 2 * tm * h * out_isz)        # output rows
    acc = tm * h * 4                          # f32 accumulator scratch
    temps = (tm * 2 * ti * 4                  # f32 gu
             + tm * ti * in_isz               # z (gated activations)
             + tm * h * 4)                    # f32 partial down-proj result
    return blocks + acc + temps + 2 * _MIB    # compiler internal scratch headroom


class PackedGemmaMLPWeights(NamedTuple):
    w_gu: jax.Array    # (n_i, H, 2*ti)   per-I-tile [gate | up] weights
    w_down: jax.Array  # (i_pad, H)       down-proj weights (I zero-padded)
    ti: int
    hidden: int
    intermediate: int


def pack_gemma_mlp_weights(w_gate, w_up, w_down, *, ti: Optional[int] = None,
                           compute_dtype=None) -> PackedGemmaMLPWeights:
    """One-time weight repack (do this at weight-load time, not per forward).

    w_gate / w_up: (hidden, intermediate)   (already transposed vs. nn.Linear)
    w_down:        (intermediate, hidden)
    ti:            intermediate tile, rounded to a multiple of 128.
    compute_dtype: e.g. jnp.bfloat16 for peak-rate MXU matmuls.
    """
    h, i = w_gate.shape
    assert w_up.shape == (h, i) and w_down.shape == (i, h)

    if ti is None:
        _, budget, _, _ = _device_info()
        ti = 1024 if budget >= 96 * _MIB else 512   # smaller tile on v7x-class VMEM
    ti = min(_round_up(ti, 128), _round_up(i, 128))  # 128-aligned lane-dense split

    i_pad = _round_up(i, ti)
    n_i = i_pad // ti
    if i_pad != i:
        # Zero padding along I is exact: gelu(0)*0 = 0 and the padded down-proj
        # rows are zero, so padded columns contribute nothing.
        w_gate = jnp.pad(w_gate, ((0, 0), (0, i_pad - i)))
        w_up = jnp.pad(w_up, ((0, 0), (0, i_pad - i)))
        w_down = jnp.pad(w_down, ((0, i_pad - i), (0, 0)))

    # Pack per-tile gate/up weights side by side: (n_i, H, 2*ti) -> one fused
    # MXU pass per I-step.
    wg_t = jnp.transpose(w_gate.reshape(h, n_i, ti), (1, 0, 2))
    wu_t = jnp.transpose(w_up.reshape(h, n_i, ti), (1, 0, 2))
    w_gu = jnp.concatenate([wg_t, wu_t], axis=-1)

    if compute_dtype is not None:
        w_gu = w_gu.astype(compute_dtype)
        w_down = w_down.astype(compute_dtype)
    return PackedGemmaMLPWeights(w_gu, w_down, ti, h, i)


def _gemma_mlp_kernel(x_ref, wgu_ref, wd_ref, o_ref, acc_ref, *, ti):
    """One (row-tile r, intermediate-tile k) grid step.

    x_ref:   (tm, H)       activation rows (block index constant over k)
    wgu_ref: (H, 2*ti)     fused [gate | up] weight tile for this k
    wd_ref:  (ti, H)       down-projection weight tile for this k
    o_ref:   (tm, H)       output rows (written on the last k step)
    acc_ref: (tm, H) f32   VMEM accumulator for the down projection
    """
    k = pl.program_id(1)

    # Single fused MXU pass for gate+up (one RHS push instead of two).
    gu = jnp.dot(x_ref[...], wgu_ref[...], preferred_element_type=jnp.float32)
    g = _gelu_tanh(gu[:, :ti])        # lane-dense split: ti % 128 == 0
    u = gu[:, ti:]
    z = (g * u).astype(wd_ref.dtype)
    part = jnp.dot(z, wd_ref[...], preferred_element_type=jnp.float32)

    # Init-by-store on the first k step: avoids a full (tm, H) f32 zero-fill
    # plus read-modify-write on the single-slot vst path.
    @pl.when(k == 0)
    def _():
        acc_ref[...] = part

    @pl.when(k > 0)
    def _():
        acc_ref[...] += part

    @pl.when(k == pl.num_programs(1) - 1)
    def _():
        o_ref[...] = acc_ref[...].astype(o_ref.dtype)


def gemma_mlp_packed(x, packed: PackedGemmaMLPWeights, *, tm: Optional[int] = None):
    """Run the fused MLP with pre-packed weights.  x: (batch, seq, hidden)."""
    b, s, h = x.shape
    assert h == packed.hidden
    n_i, h_w, two_ti = packed.w_gu.shape
    ti = packed.ti
    assert h_w == h and two_ti == 2 * ti

    out_dtype = x.dtype
    compute_dtype = packed.w_gu.dtype
    in_isz = jnp.dtype(compute_dtype).itemsize
    out_isz = jnp.dtype(out_dtype).itemsize

    kind, budget, capacity, megacore = _device_info()
    m = b * s

    if tm is None:
        # Per-generation row-tile ceiling: bigger tm amortizes weight streaming
        # (v6e prefill is weight-DMA bound at tm=512); v5e is already
        # compute-bound at 512; v7x is VMEM-limited and handled by the fit loop.
        if "v6" in kind and in_isz <= 2 and budget >= 96 * _MIB:
            tm_max = 1024
        else:
            tm_max = 512
        # Balanced tiles minimize M-padding waste; megacore-like chips get at
        # least 2 row tiles so the second TensorCore is never idle.
        min_row_tiles = 2 if (megacore and m >= 32) else 1
        n_r = max(pl.cdiv(m, tm_max), min_row_tiles)
        tm = max(16, _round_up(pl.cdiv(m, n_r), 16))
        # Shrink tm until the double-buffered working set fits the VMEM budget.
        while _vmem_estimate(tm, ti, h, in_isz, out_isz) > budget and tm > 128:
            tm = max(128, _round_up(tm // 2, 16))
    else:
        tm = max(16, _round_up(tm, 16))

    m_pad = _round_up(m, tm)
    x2 = x.reshape(m, h).astype(compute_dtype)
    if m_pad != m:
        x2 = jnp.pad(x2, ((0, m_pad - m), (0, 0)))

    est = _vmem_estimate(tm, ti, h, in_isz, out_isz)
    vmem_limit = int(min(max(budget, est), max(32 * _MIB, capacity - 4 * _MIB)))

    kernel = functools.partial(_gemma_mlp_kernel, ti=ti)

    out = pl.pallas_call(
        kernel,
        out_shape=jax.ShapeDtypeStruct((m_pad, h), out_dtype),
        grid_spec=pltpu.PrefetchScalarGridSpec(
            num_scalar_prefetch=0,
            grid=(m_pad // tm, n_i),
            in_specs=[
                pl.BlockSpec((tm, h), lambda r, k: (r, 0)),               # x rows
                pl.BlockSpec((None, h, 2 * ti), lambda r, k: (k, 0, 0)),  # [gate|up]
                pl.BlockSpec((ti, h), lambda r, k: (k, 0)),               # down tile
            ],
            out_specs=pl.BlockSpec((tm, h), lambda r, k: (r, 0)),
            scratch_shapes=[pltpu.VMEM((tm, h), jnp.float32)],
        ),
        compiler_params=pltpu.CompilerParams(
            dimension_semantics=("parallel", "arbitrary"),
            vmem_limit_bytes=vmem_limit,
        ),
    )(x2, packed.w_gu, packed.w_down)

    if m_pad != m:
        out = out[:m]
    return out.reshape(b, s, h)


def gemma_mlp(x, w_gate, w_up, w_down, *, tm=None, ti=None, compute_dtype=None):
    """Convenience wrapper: packs weights per call (tests / one-shot use).

    Production code should call `pack_gemma_mlp_weights` once at weight-load
    time and reuse the result with `gemma_mlp_packed`.
    """
    if compute_dtype is None:
        # Default the matmuls to bf16 whenever the activations are bf16.
        compute_dtype = jnp.bfloat16 if x.dtype == jnp.bfloat16 else None
    packed = pack_gemma_mlp_weights(w_gate, w_up, w_down, ti=ti,
                                    compute_dtype=compute_dtype)
    return gemma_mlp_packed(x, packed, tm=tm)


def gemma_mlp_ref(x, w_gate, w_up, w_down):
    g = _gelu_tanh(jnp.einsum("bsh,hi->bsi", x, w_gate))
    u = jnp.einsum("bsh,hi->bsi", x, w_up)
    return jnp.einsum("bsi,ih->bsh", g * u, w_down)


if __name__ == "__main__":
    key = jax.random.PRNGKey(0)
    kx, kg, ku, kd = jax.random.split(key, 4)

    # --- small config consistent with the module's forward ---
    batch, seq, hidden, intermediate = 2, 8, 32, 64
    x = jax.random.normal(kx, (batch, seq, hidden), dtype=jnp.float32)
    w_gate = (jax.random.normal(kg, (hidden, intermediate), jnp.float32)
              / math.sqrt(hidden))
    w_up = (jax.random.normal(ku, (hidden, intermediate), jnp.float32)
            / math.sqrt(hidden))
    w_down = (jax.random.normal(kd, (intermediate, hidden), jnp.float32)
              / math.sqrt(intermediate))

    ref = gemma_mlp_ref(x, w_gate, w_up, w_down)

    # Convenience path (packs per call).
    out = jax.block_until_ready(gemma_mlp(x, w_gate, w_up, w_down))
    assert out.shape == (batch, seq, hidden)
    assert jnp.allclose(out, ref, atol=1e-4, rtol=1e-4), "f32 mismatch vs reference"

    # Production path: pack once, reuse.
    packed = pack_gemma_mlp_weights(w_gate, w_up, w_down)
    out_p = jax.block_until_ready(gemma_mlp_packed(x, packed))
    assert jnp.allclose(out_p, ref, atol=1e-4, rtol=1e-4), "packed-path mismatch"

    # --- padding + multi-tile I streaming (non-divisible M, 3 I-tiles) ---
    b2, s2, h2, i2 = 2, 100, 128, 384
    k2 = jax.random.split(jax.random.PRNGKey(1), 4)
    x_b = jax.random.normal(k2[0], (b2, s2, h2), jnp.float32)
    wg_b = jax.random.normal(k2[1], (h2, i2), jnp.float32) / math.sqrt(h2)
    wu_b = jax.random.normal(k2[2], (h2, i2), jnp.float32) / math.sqrt(h2)
    wd_b = jax.random.normal(k2[3], (i2, h2), jnp.float32) / math.sqrt(i2)
    out_b = jax.block_until_ready(gemma_mlp(x_b, wg_b, wu_b, wd_b, tm=128, ti=128))
    ref_b = gemma_mlp_ref(x_b, wg_b, wu_b, wd_b)
    assert out_b.shape == (b2, s2, h2)
    assert jnp.allclose(out_b, ref_b, atol=1e-2, rtol=1e-2), "tiled f32 mismatch"

    # --- bf16 compute path (real-model regime), looser tolerance ---
    out_bf16 = jax.block_until_ready(
        gemma_mlp(x, w_gate, w_up, w_down, compute_dtype=jnp.bfloat16))
    assert jnp.allclose(out_bf16, ref, atol=1e-1, rtol=1e-1), "bf16 mismatch"

    print("KERNEL_OK")
</pallas_src>

<mosaic_0001>
module attributes {stable_mosaic.version = 11 : i64} {
  func.func @_gemma_mlp_kernel(%arg0: i32, %arg1: i32, %arg2: memref<16x32xf32, #tpu.memory_space<vmem>>, %arg3: memref<1x32x256xf32, #tpu.memory_space<vmem>>, %arg4: memref<128x32xf32, #tpu.memory_space<vmem>>, %arg5: memref<16x32xf32, #tpu.memory_space<vmem>>, %arg6: memref<16x32xf32, #tpu.memory_space<vmem>>) attributes {dimension_semantics = [#tpu.dimension_semantics<parallel>, #tpu.dimension_semantics<arbitrary>], iteration_bounds = array<i64: 1, 1>, scalar_prefetch = 0 : i64, scratch_operands = 1 : i64, tpu.core_type = #tpu.core_type<tc>, window_params = [{transform_indices = @transform_0, window_bounds = array<i64: 16, 32>}, {transform_indices = @transform_1, window_bounds = array<i64: 1, 32, 256>}, {transform_indices = @transform_2, window_bounds = array<i64: 128, 32>}, {transform_indices = @transform_3, window_bounds = array<i64: 16, 32>}]} {
    %c0 = arith.constant 0 : index
    %c0_0 = arith.constant 0 : index
    %0 = vector.load %arg2[%c0, %c0_0] : memref<16x32xf32, #tpu.memory_space<vmem>>, vector<16x32xf32>
    %c0_1 = arith.constant 0 : index
    %c0_2 = arith.constant 0 : index
    %c0_3 = arith.constant 0 : index
    %1 = vector.load %arg3[%c0_1, %c0_2, %c0_3] : memref<1x32x256xf32, #tpu.memory_space<vmem>>, vector<1x32x256xf32>
    %2 = vector.shape_cast %1 : vector<1x32x256xf32> to vector<32x256xf32>
    %cst = arith.constant dense<0.000000e+00> : vector<16x256xf32>
    %3 = tpu.matmul %0, %2, %cst {dimension_numbers = #tpu.dot_dimension_numbers<[1], [0], [0], [1], [0, 0, 1, 1], [], []>} : vector<16x32xf32>, vector<32x256xf32>, vector<16x256xf32> -> vector<16x256xf32>
    %4 = vector.extract_strided_slice %3 {offsets = [0, 0], sizes = [16, 128], strides = [1, 1]} : vector<16x256xf32> to vector<16x128xf32>
    %cst_4 = arith.constant 5.000000e-01 : f32
    %5 = vector.broadcast %cst_4 : f32 to vector<16x128xf32>
    %6 = arith.mulf %5, %4 : vector<16x128xf32>
    %cst_5 = arith.constant 4.471500e-02 : f32
    %7 = vector.broadcast %cst_5 : f32 to vector<16x128xf32>
    %8 = arith.mulf %7, %4 : vector<16x128xf32>
    %9 = arith.mulf %8, %4 : vector<16x128xf32>
    %10 = arith.mulf %9, %4 : vector<16x128xf32>
    %11 = arith.addf %4, %10 : vector<16x128xf32>
    %cst_6 = arith.constant 0.797884583 : f32
    %12 = vector.broadcast %cst_6 : f32 to vector<16x128xf32>
    %13 = arith.mulf %12, %11 : vector<16x128xf32>
    %14 = math.tanh %13 : vector<16x128xf32>
    %cst_7 = arith.constant 1.000000e+00 : f32
    %15 = vector.broadcast %cst_7 : f32 to vector<16x128xf32>
    %16 = arith.addf %15, %14 : vector<16x128xf32>
    %17 = arith.mulf %6, %16 : vector<16x128xf32>
    %18 = vector.extract_strided_slice %3 {offsets = [0, 128], sizes = [16, 128], strides = [1, 1]} : vector<16x256xf32> to vector<16x128xf32>
    %19 = arith.mulf %17, %18 : vector<16x128xf32>
    %c0_8 = arith.constant 0 : index
    %c0_9 = arith.constant 0 : index
    %20 = vector.load %arg4[%c0_8, %c0_9] : memref<128x32xf32, #tpu.memory_space<vmem>>, vector<128x32xf32>
    %cst_10 = arith.constant dense<0.000000e+00> : vector<16x32xf32>
    %21 = tpu.matmul %19, %20, %cst_10 {dimension_numbers = #tpu.dot_dimension_numbers<[1], [0], [0], [1], [0, 0, 1, 1], [], []>} : vector<16x128xf32>, vector<128x32xf32>, vector<16x32xf32> -> vector<16x32xf32>
    %c0_i32 = arith.constant 0 : i32
    %22 = arith.cmpi eq, %arg1, %c0_i32 : i32
    %23 = arith.extui %22 : i1 to i32
    %c0_i32_11 = arith.constant 0 : i32
    %24 = arith.cmpi ne, %23, %c0_i32_11 : i32
    scf.if %24 {
      %c0_16 = arith.constant 0 : index
      %c0_17 = arith.constant 0 : index
      %31 = vector.load %arg6[%c0_16, %c0_17] : memref<16x32xf32, #tpu.memory_space<vmem>>, vector<16x32xf32>
      tpu.vector_store %arg6[%c0_16, %c0_17], %21 {strides = array<i32>} : memref<16x32xf32, #tpu.memory_space<vmem>>, vector<16x32xf32>,
    } else {
    }
    %c0_i32_12 = arith.constant 0 : i32
    %25 = arith.cmpi sgt, %arg1, %c0_i32_12 : i32
    %26 = arith.extui %25 : i1 to i32
    %c0_i32_13 = arith.constant 0 : i32
    %27 = arith.cmpi ne, %26, %c0_i32_13 : i32
    scf.if %27 {
      %c0_16 = arith.constant 0 : index
      %c0_17 = arith.constant 0 : index
      %31 = vector.load %arg6[%c0_16, %c0_17] : memref<16x32xf32, #tpu.memory_space<vmem>>, vector<16x32xf32>
      %32 = arith.addf %31, %21 : vector<16x32xf32>
      %c0_18 = arith.constant 0 : index
      %c0_19 = arith.constant 0 : index
      %33 = vector.load %arg6[%c0_18, %c0_19] : memref<16x32xf32, #tpu.memory_space<vmem>>, vector<16x32xf32>
      tpu.vector_store %arg6[%c0_18, %c0_19], %32 {strides = array<i32>} : memref<16x32xf32, #tpu.memory_space<vmem>>, vector<16x32xf32>,
    } else {
    }
    %c0_i32_14 = arith.constant 0 : i32
    %28 = arith.cmpi eq, %arg1, %c0_i32_14 : i32
    %29 = arith.extui %28 : i1 to i32
    %c0_i32_15 = arith.constant 0 : i32
    %30 = arith.cmpi ne, %29, %c0_i32_15 : i32
    scf.if %30 {
      %c0_16 = arith.constant 0 : index
      %c0_17 = arith.constant 0 : index
      %31 = vector.load %arg6[%c0_16, %c0_17] : memref<16x32xf32, #tpu.memory_space<vmem>>, vector<16x32xf32>
      %c0_18 = arith.constant 0 : index
      %c0_19 = arith.constant 0 : index
      %32 = vector.load %arg5[%c0_18, %c0_19] : memref<16x32xf32, #tpu.memory_space<vmem>>, vector<16x32xf32>
      tpu.vector_store %arg5[%c0_18, %c0_19], %31 {strides = array<i32>} : memref<16x32xf32, #tpu.memory_space<vmem>>, vector<16x32xf32>,
    } else {
    }
    return
  }
  func.func @transform_0(%arg0: i32, %arg1: i32) -> (i32, i32) {
    %c0_i32 = arith.constant 0 : i32
    %c0_i32_0 = arith.constant 0 : i32
    return %arg0, %c0_i32 : i32, i32
  }
  func.func @transform_1(%arg0: i32, %arg1: i32) -> (i32, i32, i32) {
    %c0_i32 = arith.constant 0 : i32
    %c0_i32_0 = arith.constant 0 : i32
    %c0_i32_1 = arith.constant 0 : i32
    return %arg1, %c0_i32, %c0_i32_0 : i32, i32, i32
  }
  func.func @transform_2(%arg0: i32, %arg1: i32) -> (i32, i32) {
    %c0_i32 = arith.constant 0 : i32
    %c0_i32_0 = arith.constant 0 : i32
    return %arg1, %c0_i32 : i32, i32
  }
  func.func @transform_3(%arg0: i32, %arg1: i32) -> (i32, i32) {
    %c0_i32 = arith.constant 0 : i32
    %c0_i32_0 = arith.constant 0 : i32
    return %arg0, %c0_i32 : i32, i32
  }
}

</mosaic_0001>

<llo_original>
// kernel: tpu_custom_call.1
$region0: #{tpu_custom_call.1}
  #allocation0 [shape = 'u32[]', space=smem, size = 0x4, offset = 0x4, fixed_abs, tag = 'smem constant byte address 0x4 - core index']
  #allocation1 [shape = 'u32[144,128]{1,0:T(1,128)}', space=vmem, size = 0x12000, scoped, tag = 'internal scratch']
  #allocation2 [shape = 'f32[16,32]{1,0:T(8,128)}', space=vmem, size = 0x2000, scoped, tag = 'scratch operand']
  %s0 = inlined_call_operand.vmem [shape: f32[16,32], index: 0, kind: input, shape index: {}]
  %s1 = inlined_call_operand.vmem [shape: f32[1,32,256], index: 1, kind: input, shape index: {}]
  %s2 = inlined_call_operand.vmem [shape: f32[128,32], index: 2, kind: input, shape index: {}]
  %s3 = inlined_call_operand.hbm [shape: f32[16,32], index: 3, kind: output, shape index: {}]
  %s4 = sld [smem:[#allocation0]]
  $region34: #{tpu_custom_call.1} parent=0
    _
  %s6 = ssub.s32 1, %s4
  %s7 = scalar_select 0, %s6, %s4
  $region1: #{tpu_custom_call.1} parent=0
    #allocation3 [shape = 'u8[8192]{0}', space=vmem, size = 0x2000, scoped, tag = 'output window, operand 0, single buffered']
    #allocation4 [shape = 's32[1]{0}', space=sflag, size = 0x4, scoped, tag = 'scoped memory for tpu_custom_call.1']
    %8 = vsyncpa [#allocation4], 0
    // Predicated region
    $region2: #{tpu_custom_call.1} parent=1 // pred_check
      _
    $region3: #{tpu_custom_call.1} parent=1 // pred_check_branch
      %10 = sbr.rel (0) target = $region5
    $region4: #{tpu_custom_call.1} parent=1 // pred_region
      _
    $region5: #{tpu_custom_call.1} parent=1 // pred_fallthru
      _
    // Predicated region
    $region6: #{tpu_custom_call.1} parent=1 // pred_check
      _
    $region7: #{tpu_custom_call.1} parent=1 // pred_check_branch
      %12 = sbr.rel (0) target = $region9
    $region8: #{tpu_custom_call.1} parent=1 // pred_region
      _
    $region9: #{tpu_custom_call.1} parent=1 // pred_fallthru
      _
    // Predicated region
    $region10: #{tpu_custom_call.1} parent=1 // pred_check
      _
    $region11: #{tpu_custom_call.1} parent=1 // pred_check_branch
      %14 = sbr.rel (0) target = $region13
    $region12: #{tpu_custom_call.1} parent=1 // pred_region
      _
    $region13: #{tpu_custom_call.1} parent=1 // pred_fallthru
      _
    %v15 = vld [vmem:[%s0] sm:$0xff]
    %v16 = vld [vmem:[%s0 + $0x8] sm:$0xff]
    %v17 = vld [vmem:[%s1] sm:$0xff]
    %v18 = vld [vmem:[%s1 + $0x8] sm:$0xff]
    %v19 = vld [vmem:[%s1 + $0x10] sm:$0xff]
    %v20 = vld [vmem:[%s1 + $0x18] sm:$0xff]
    %v21 = vld [vmem:[%s1 + $0x20] sm:$0xff]
    %v22 = vld [vmem:[%s1 + $0x28] sm:$0xff]
    %v23 = vld [vmem:[%s1 + $0x30] sm:$0xff]
    %v24 = vld [vmem:[%s1 + $0x38] sm:$0xff]
    %vm25 = vcmask 261120
    %v27 = vsel %vm25, %v15, 0
    %v30 = vsel %vm25, %v16, 0
    %32 = vmatprep.subr.mxu0 %v18
    %33 = vmatpush1.msra.mxu0 %v17
    %34 = vmatprep.subr.mxu0 %v20
    %35 = vmatpush1.msra.mxu0 %v19
    %36 = vmatprep.subr.mxu0 %v22
    %37 = vmatpush1.msra.mxu0 %v21
    %38 = vmatprep.subr.mxu0 %v24
    %39 = vmatpush1.msra.mxu0 %v23
    %40 = vmatprep.subr.mxu0 0.0
    %41 = vmatpush1.msra.mxu0 0.0
    %42 = vmatprep.subr.mxu0 0.0
    %43 = vmatpush1.msra.mxu0 0.0
    %44 = vmatprep.subr.mxu0 0.0
    %45 = vmatpush1.msra.mxu0 0.0
    %46 = vmatprep.subr.mxu0 0.0
    %47 = vmatpush1.msra.mxu0 0.0
    %48 = vmatprep.subr.mxu0 0.0
    %49 = vmatpush1.msra.mxu0 0.0
    %50 = vmatprep.subr.mxu0 0.0
    %51 = vmatpush1.msra.mxu0 0.0
    %52 = vmatprep.subr.mxu0 0.0
    %53 = vmatpush1.msra.mxu0 0.0
    %54 = vmatprep.subr.mxu0 0.0
    %55 = vmatpush1.msra.mxu0 0.0
    %56 = vmatprep.subr.mxu0 0.0
    %57 = vmatpush1.msra.mxu0 0.0
    %58 = vmatprep.subr.mxu0 0.0
    %59 = vmatpush1.msra.mxu0 0.0
    %60 = vmatprep.subr.mxu0 0.0
    %61 = vmatpush1.msra.mxu0 0.0
    %62 = vmatprep.subr.mxu0 0.0
    %63 = vmatpush1.msra.mxu0 0.0
    %64 = vmatprep.subr.mxu0 0.0
    %65 = vmatpush1.msra.mxu0 0.0
    %66 = vmatprep.subr.mxu0 0.0
    %67 = vmatpush1.msra.mxu0 0.0
    %68 = vmatprep.subr.mxu0 0.0
    %69 = vmatpush1.msra.mxu0 0.0
    %70 = vmatprep.subr.mxu0 0.0
    %71 = vmatpush1.msra.mxu0 0.0
    %72 = vmatprep.subr.mxu0 0.0
    %73 = vmatpush1.msra.mxu0 0.0
    %74 = vmatprep.subr.mxu0 0.0
    %75 = vmatpush1.msra.mxu0 0.0
    %76 = vmatprep.subr.mxu0 0.0
    %77 = vmatpush1.msra.mxu0 0.0
    %78 = vmatprep.subr.mxu0 0.0
    %79 = vmatpush1.msra.mxu0 0.0
    %80 = vmatprep.subr.mxu0 0.0
    %81 = vmatpush1.msra.mxu0 0.0
    %82 = vmatprep.subr.mxu0 0.0
    %83 = vmatpush1.msra.mxu0 0.0
    %84 = vmatprep.subr.mxu0 0.0
    %85 = vmatpush1.msra.mxu0 0.0
    %86 = vmatprep.subr.mxu0 0.0
    %87 = vmatpush1.msra.mxu0 0.0
    %88 = vmatprep.subr.mxu0 0.0
    %89 = vmatpush1.msra.mxu0 0.0
    %90 = vmatprep.subr.mxu0 0.0
    %91 = vmatpush1.msra.mxu0 0.0
    %92 = vmatprep.subr.mxu0 0.0
    %93 = vmatpush1.msra.mxu0 0.0
    %94 = vmatprep.subr.mxu0 0.0
    %95 = vmatpush1.msra.mxu0 0.0
    %96 = vmatprep.mubr.f32.mxu0 0.0
    %97 = vmatmul.mubr.f32.gmra.mrb[0].mxu0 %v27
    %v98 = vpop.f32.mrb[0].mxu0
    %v99 = vadd.f32 0.0, %v98
    %v100 = vpop.f32.mrb[0].mxu0
    %v101 = vadd.f32 0.0, %v100
    %102 = vmatprep.mubr.f32.mxu0 0.0
    %103 = vmatmul.mubr.f32.gmra.mrb[0].mxu0 %v30
    %v104 = vpop.f32.mrb[0].mxu0
    %v105 = vadd.f32 0.0, %v104
    %v106 = vpop.f32.mrb[0].mxu0
    %v107 = vadd.f32 0.0, %v106
    %108 = vdwg.mxu0
    %v109 = vmul.f32 %v99, 0.5
    %v110 = vmul.f32 %v105, 0.5
    %v111 = vmul.f32 %v99, 0.044715
    %v112 = vmul.f32 %v105, 0.044715
    %v113 = vmul.f32 %v111, %v99
    %v114 = vmul.f32 %v112, %v105
    %v115 = vmul.f32 %v113, %v99
    %v116 = vmul.f32 %v114, %v105
    %v117 = vadd.f32 %v99, %v115
    %v118 = vadd.f32 %v105, %v116
    %v119 = vmul.f32 %v117, 0.7978846
    %v120 = vmul.f32 %v118, 0.7978846
    %v121 = vtanh.pop %v119
    %v122 = vtanh.pop %v120
    %v123 = vadd.f32 %v121, 1.0
    %v124 = vadd.f32 %v122, 1.0
    %v125 = vmul.f32 %v109, %v123
    %v126 = vmul.f32 %v110, %v124
    %v127 = vmul.f32 %v125, %v101
    %v128 = vmul.f32 %v126, %v107
    %v129 = vld [vmem:[%s2] sm:$0xff]
    %v130 = vld [vmem:[%s2 + $0x8] sm:$0xff]
    %v131 = vld [vmem:[%s2 + $0x10] sm:$0xff]
    %v132 = vld [vmem:[%s2 + $0x18] sm:$0xff]
    %v133 = vld [vmem:[%s2 + $0x20] sm:$0xff]
    %v134 = vld [vmem:[%s2 + $0x28] sm:$0xff]
    %v135 = vld [vmem:[%s2 + $0x30] sm:$0xff]
    %v136 = vld [vmem:[%s2 + $0x38] sm:$0xff]
    %v137 = vld [vmem:[%s2 + $0x40] sm:$0xff]
    %v138 = vld [vmem:[%s2 + $0x48] sm:$0xff]
    %v139 = vld [vmem:[%s2 + $0x50] sm:$0xff]
    %v140 = vld [vmem:[%s2 + $0x58] sm:$0xff]
    %v141 = vld [vmem:[%s2 + $0x60] sm:$0xff]
    %v142 = vld [vmem:[%s2 + $0x68] sm:$0xff]
    %v143 = vld [vmem:[%s2 + $0x70] sm:$0xff]
    %v144 = vld [vmem:[%s2 + $0x78] sm:$0xff]
    %145 = vmatprep.subr.mxu0 0.0
    %146 = vmatpush1.msra.mxu0 %v129
    %147 = vmatprep.subr.mxu0 0.0
    %148 = vmatpush1.msra.mxu0 %v130
    %149 = vmatprep.subr.mxu0 0.0
    %150 = vmatpush1.msra.mxu0 %v131
    %151 = vmatprep.subr.mxu0 0.0
    %152 = vmatpush1.msra.mxu0 %v132
    %153 = vmatprep.subr.mxu0 0.0
    %154 = vmatpush1.msra.mxu0 %v133
    %155 = vmatprep.subr.mxu0 0.0
    %156 = vmatpush1.msra.mxu0 %v134
    %157 = vmatprep.subr.mxu0 0.0
    %158 = vmatpush1.msra.mxu0 %v135
    %159 = vmatprep.subr.mxu0 0.0
    %160 = vmatpush1.msra.mxu0 %v136
    %161 = vmatprep.subr.mxu0 0.0
    %162 = vmatpush1.msra.mxu0 %v137
    %163 = vmatprep.subr.mxu0 0.0
    %164 = vmatpush1.msra.mxu0 %v138
    %165 = vmatprep.subr.mxu0 0.0
    %166 = vmatpush1.msra.mxu0 %v139
    %167 = vmatprep.subr.mxu0 0.0
    %168 = vmatpush1.msra.mxu0 %v140
    %169 = vmatprep.subr.mxu0 0.0
    %170 = vmatpush1.msra.mxu0 %v141
    %171 = vmatprep.subr.mxu0 0.0
    %172 = vmatpush1.msra.mxu0 %v142
    %173 = vmatprep.subr.mxu0 0.0
    %174 = vmatpush1.msra.mxu0 %v143
    %175 = vmatprep.subr.mxu0 0.0
    %176 = vmatpush1.msra.mxu0 %v144
    %177 = vmatprep.subr.mxu0 0.0
    %178 = vmatpush1.msra.mxu0 0.0
    %179 = vmatprep.subr.mxu0 0.0
    %180 = vmatpush1.msra.mxu0 0.0
    %181 = vmatprep.subr.mxu0 0.0
    %182 = vmatpush1.msra.mxu0 0.0
    %183 = vmatprep.subr.mxu0 0.0
    %184 = vmatpush1.msra.mxu0 0.0
    %185 = vmatprep.subr.mxu0 0.0
    %186 = vmatpush1.msra.mxu0 0.0
    %187 = vmatprep.subr.mxu0 0.0
    %188 = vmatpush1.msra.mxu0 0.0
    %189 = vmatprep.subr.mxu0 0.0
    %190 = vmatpush1.msra.mxu0 0.0
    %191 = vmatprep.subr.mxu0 0.0
    %192 = vmatpush1.msra.mxu0 0.0
    %193 = vmatprep.subr.mxu0 0.0
    %194 = vmatpush1.msra.mxu0 0.0
    %195 = vmatprep.subr.mxu0 0.0
    %196 = vmatpush1.msra.mxu0 0.0
    %197 = vmatprep.subr.mxu0 0.0
    %198 = vmatpush1.msra.mxu0 0.0
    %199 = vmatprep.subr.mxu0 0.0
    %200 = vmatpush1.msra.mxu0 0.0
    %201 = vmatprep.subr.mxu0 0.0
    %202 = vmatpush1.msra.mxu0 0.0
    %203 = vmatprep.subr.mxu0 0.0
    %204 = vmatpush1.msra.mxu0 0.0
    %205 = vmatprep.subr.mxu0 0.0
    %206 = vmatpush1.msra.mxu0 0.0
    %207 = vmatprep.subr.mxu0 0.0
    %208 = vmatpush1.msra.mxu0 0.0
    %209 = vmatprep.mubr.f32.mxu0 0.0
    %210 = vmatmul.mubr.f32.gmra.mrb[0].mxu0 %v127
    %v211 = vpop.f32.mrb[0].mxu0
    %v212 = vadd.f32 0.0, %v211
    %v213 = vpop.f32.mrb[0].mxu0
    %214 = vmatprep.mubr.f32.mxu0 0.0
    %215 = vmatmul.mubr.f32.gmra.mrb[0].mxu0 %v128
    %v216 = vpop.f32.mrb[0].mxu0
    %v217 = vadd.f32 0.0, %v216
    %v218 = vpop.f32.mrb[0].mxu0
    %219 = vdwg.mxu0
    %p220 = scmp.eq.s32.totalorder 0, 0
    // Predicated region
    $region14: #{tpu_custom_call.1} parent=1 // pred_check
      %p221 = pneg %p220
    $region15: #{tpu_custom_call.1} parent=1 // pred_check_branch
      %223 = sbr.rel (%p221) target = $region17
    $region16: #{tpu_custom_call.1} parent=1 // pred_region
      %224 = vst.msk [vmem:[#allocation2] sm:$0xff] %vm25, %v212
      %225 = vst.msk [vmem:[#allocation2 + $0x8] sm:$0xff] %vm25, %v217
    $region17: #{tpu_custom_call.1} parent=1 // pred_fallthru
      _
    %p226 = scmp.gt.s32.totalorder 0, 0
    // Predicated region
    $region18: #{tpu_custom_call.1} parent=1 // pred_check
      %p227 = pneg %p226
    $region19: #{tpu_custom_call.1} parent=1 // pred_check_branch
      %229 = sbr.rel (%p227) target = $region21
    $region20: #{tpu_custom_call.1} parent=1 // pred_region
      %v230 = vld [vmem:[#allocation2] sm:$0xff]
      %v231 = vld [vmem:[#allocation2 + $0x8] sm:$0xff]
      %v232 = vadd.f32 %v230, %v212
      %v233 = vadd.f32 %v231, %v217
      %234 = vst.msk [vmem:[#allocation2] sm:$0xff] %vm25, %v232
      %235 = vst.msk [vmem:[#allocation2 + $0x8] sm:$0xff] %vm25, %v233
    $region21: #{tpu_custom_call.1} parent=1 // pred_fallthru
      _
    // Predicated region
    $region22: #{tpu_custom_call.1} parent=1 // pred_check
      %p236 = pneg %p220
    $region23: #{tpu_custom_call.1} parent=1 // pred_check_branch
      %238 = sbr.rel (%p236) target = $region25
    $region24: #{tpu_custom_call.1} parent=1 // pred_region
      %v239 = vld [vmem:[#allocation2] sm:$0xff]
      %v240 = vld [vmem:[#allocation2 + $0x8] sm:$0xff]
      %241 = vst.msk [vmem:[#allocation3] sm:$0xff] %vm25, %v239
      %242 = vst.msk [vmem:[#allocation3 + $0x8] sm:$0xff] %vm25, %v240
    $region25: #{tpu_custom_call.1} parent=1 // pred_fallthru
      _
    // Predicated region
    $region26: #{tpu_custom_call.1} parent=1 // pred_check
      _
    $region27: #{tpu_custom_call.1} parent=1 // pred_check_branch
      %244 = sbr.rel (0) target = $region29
    $region28: #{tpu_custom_call.1} parent=1 // pred_region
      %s246 = ssub.s32 256, 256
      %247 = vsyncadd [#allocation4], %s246
      %s248 = sshll.u32 [#allocation3], 4
      %s249 = int_to_ptr.vmem [resolvable:$true] %s248
      %254 = dma.vmem_to_hbm [thread:$0]  %s249, 256, %s3, [#allocation4], 128, 128, 8
    $region29: #{tpu_custom_call.1} parent=1 // pred_fallthru
      _
    // Predicated region
    $region30: #{tpu_custom_call.1} parent=1 // pred_check
      _
    $region31: #{tpu_custom_call.1} parent=1 // pred_check_branch
      %256 = sbr.rel (0) target = $region33
    $region32: #{tpu_custom_call.1} parent=1 // pred_region
      %257 = dma.done [#allocation4], 256
    $region33: #{tpu_custom_call.1} parent=1 // pred_fallthru
      _
    %258 = vsyncpa [#allocation4], 1

</llo_original>
